<compile_context>
chip_gen: v7x
topology: tpu7x:2x2x1
jax: 0.10.0
libtpu: 0.0.40
codegen_flags: <defaults>
</compile_context>

<pallas_src>
import jax
import jax.numpy as jnp
from jax.experimental import pallas as pl
from jax.experimental.pallas import tpu as pltpu

_LANES = 128
_MIN_TILE = 8 * _LANES          # zero-copy (rows, 128) view granule (1024 elems)
_CHUNK_ROWS = 1024              # in-kernel sub-chunk: caps int32 temp at 512 KiB


def _sublane_granule(dtype) -> int:
    # Packed-dtype sublane multiples: 32 for 1-byte, 16 for 2-byte, 8 for 4-byte.
    return {1: 32, 2: 16}.get(jnp.dtype(dtype).itemsize, 8)


def _default_block_bytes() -> int:
    vmem_bytes = 64 * 1024 * 1024
    try:
        vmem_bytes = int(pltpu.get_tpu_info().vmem_capacity_bytes)
    except Exception:
        pass
    # 2 inputs x 2 pipeline buffers must sit comfortably inside the 32 MiB
    # scoped budget we request below (v7x has only 64 MiB physical VMEM).
    return int(min(4 * 1024 * 1024, max(512 * 1024, vmem_bytes // 16)))


def _make_kernel(*, block_rows, blocks_per_shard, num_blocks, last_block_rows,
                 common_dtype):
    chunk = min(block_rows, _CHUNK_ROWS)

    def accumulate(yhat_ref, y_ref, acc_ref, valid_rows):
        # Statically-unrolled sub-chunk loop: keeps the int32 compare
        # intermediate small so VMEM stays available for large input blocks.
        total = jnp.zeros((8, _LANES), jnp.int32)
        for r0 in range(0, block_rows, chunk):
            if valid_rows is not None and r0 >= valid_rows:
                break                      # statically skip fully-invalid chunks
            cr = min(chunk, block_rows - r0)
            a = yhat_ref[pl.ds(r0, cr), :]
            b = y_ref[pl.ds(r0, cr), :]
            # In-VMEM per-chunk cast when input dtypes differ (no HBM pass).
            if a.dtype != common_dtype:
                a = a.astype(common_dtype)
            if b.dtype != common_dtype:
                b = b.astype(common_dtype)
            eq = (a == b).astype(jnp.int32)
            if valid_rows is not None and r0 + cr > valid_rows:
                row = jax.lax.broadcasted_iota(jnp.int32, (cr, _LANES), 0)
                eq = jnp.where(row < (valid_rows - r0), eq, 0)
            # Pure VPU fold onto an (8,128) slab stack; no cross-lane work.
            total = total + jnp.sum(eq.reshape(cr // 8, 8, _LANES), axis=0)
        acc_ref[...] += total

    def kernel(yhat_ref, y_ref, acc_ref):
        c = pl.program_id(0)               # shard (parallel; both TCs on v7x)
        i = pl.program_id(1)               # block within shard (arbitrary)
        gb = c * blocks_per_shard + i      # global block index

        @pl.when(i == 0)
        def _init():
            acc_ref[...] = jnp.zeros_like(acc_ref)

        if last_block_rows == block_rows:
            # No ragged final block: single unmasked path (gate only guards the
            # few padded grid points created by uneven shard rounding).
            @pl.when(gb <= num_blocks - 1)
            def _all():
                accumulate(yhat_ref, y_ref, acc_ref, None)
        else:
            @pl.when(gb < num_blocks - 1)
            def _full():
                accumulate(yhat_ref, y_ref, acc_ref, None)

            @pl.when(gb == num_blocks - 1)
            def _last():
                accumulate(yhat_ref, y_ref, acc_ref, last_block_rows)

    return kernel


def bvr_accuracy(yhat, y, transform=None, *, block_bytes=None, num_shards=2,
                 min_pallas_elems=64 * 1024):
    """mean((yhat == y).float()) computed on TPU via Pallas."""
    if transform is not None:
        # TODO(synk): `transform` is an arbitrary user callable; it is applied
        # as plain JAX outside the kernel rather than fused into it.
        yhat = transform(yhat)

    assert yhat.shape == y.shape, "prediction/target shape mismatch"
    n_true = int(yhat.size)
    if n_true == 0:
        return jnp.float32(jnp.nan)        # torch.mean of empty tensor -> nan

    common = jnp.result_type(yhat.dtype, y.dtype)

    # Fallback: tiny inputs (launch/pipeline overhead dominates) or counts that
    # cannot be viewed as (rows, 128) without an extra HBM copy.
    if n_true < min_pallas_elems or n_true % _MIN_TILE != 0:
        return jnp.mean(
            (yhat.astype(common) == y.astype(common)).astype(jnp.float32))

    # Zero-copy (rows, 128) views, native dtypes (no promotion pass in HBM).
    yhat2 = yhat.reshape(-1).reshape(-1, _LANES)
    y2 = y.reshape(-1).reshape(-1, _LANES)
    rows = yhat2.shape[0]                  # multiple of 8 by construction

    granule = max(_sublane_granule(yhat.dtype), _sublane_granule(y.dtype))
    max_item = max(jnp.dtype(yhat.dtype).itemsize, jnp.dtype(y.dtype).itemsize)
    if block_bytes is None:
        block_bytes = _default_block_bytes()
    target_rows = max(granule,
                      (block_bytes // (_LANES * max_item)) // granule * granule)
    block_rows = rows if rows <= target_rows else target_rows
    num_blocks = pl.cdiv(rows, block_rows)
    num_shards = max(1, min(int(num_shards), num_blocks))
    blocks_per_shard = pl.cdiv(num_blocks, num_shards)
    last_block_rows = rows - (num_blocks - 1) * block_rows

    kernel = _make_kernel(block_rows=block_rows,
                          blocks_per_shard=blocks_per_shard,
                          num_blocks=num_blocks,
                          last_block_rows=last_block_rows,
                          common_dtype=common)

    def in_map(c, i):
        # Clamp the (few) padded grid points from uneven shard rounding onto
        # the last valid block; the kernel skips their accumulation.
        return (jnp.minimum(c * blocks_per_shard + i, num_blocks - 1), 0)

    partial = pl.pallas_call(
        kernel,
        out_shape=jax.ShapeDtypeStruct((num_shards * 8, _LANES), jnp.int32),
        grid_spec=pltpu.PrefetchScalarGridSpec(
            num_scalar_prefetch=0,
            grid=(num_shards, blocks_per_shard),
            in_specs=[pl.BlockSpec((block_rows, _LANES), in_map),
                      pl.BlockSpec((block_rows, _LANES), in_map)],
            out_specs=pl.BlockSpec((8, _LANES), lambda c, i: (c, 0)),
        ),
        compiler_params=pltpu.CompilerParams(
            dimension_semantics=("parallel", "arbitrary"),
            vmem_limit_bytes=32 * 1024 * 1024,
        ),
    )(yhat2, y2)

    # Single cross-lane reduction + scalar division, once, outside the kernel.
    # float64 keeps the count exact for N > 2^24 when jax_enable_x64 is on;
    # otherwise float32 (which matches torch.mean((..).float()) precision).
    wide = jnp.float64 if getattr(jax.config, "jax_enable_x64", False) else jnp.float32
    count = jnp.sum(partial, dtype=wide)
    return (count / jnp.asarray(n_true, wide)).astype(jnp.float32)


if __name__ == "__main__":
    key = jax.random.PRNGKey(0)
    k1, k2, k3, k4, k5, k6 = jax.random.split(key, 6)

    # 1) Primary case: per-pixel class predictions vs labels, NCHW-like
    #    [2, 4, 16, 16], compared in native int32.  min_pallas_elems=0 forces
    #    the Pallas path even for this small demo tensor.
    shape = (2, 4, 16, 16)
    yhat = jax.random.randint(k1, shape, 0, 3, dtype=jnp.int32)
    y = jax.random.randint(k2, shape, 0, 3, dtype=jnp.int32)
    acc = jax.block_until_ready(bvr_accuracy(yhat, y, min_pallas_elems=0))
    ref = jnp.mean((yhat == y).astype(jnp.float32))
    assert jnp.allclose(acc, ref, atol=1e-6), (acc, ref)

    # 2) Multi-block + 2 shards + ragged last block + mixed dtype (bf16 vs f32,
    #    cast done per-chunk inside the kernel).  Tiny block budget forces many
    #    blocks so both grid axes and the in-kernel row mask are exercised.
    shape2 = (328, 128)
    base = jnp.round(jax.random.normal(k3, shape2) * 1.5)
    flip = jax.random.bernoulli(k4, 0.3, shape2).astype(jnp.float32)
    a = (base + flip).astype(jnp.bfloat16)
    b = base.astype(jnp.float32)
    acc2 = jax.block_until_ready(
        bvr_accuracy(a, b, block_bytes=16 * 128 * 4, min_pallas_elems=0))
    ref2 = jnp.mean((a.astype(jnp.float32) == b).astype(jnp.float32))
    assert jnp.allclose(acc2, ref2, atol=1e-6), (acc2, ref2)

    # 3) Misaligned / tiny input -> plain-XLA fallback path (no pad copy).
    shape3 = (3, 5, 7)
    c = jnp.round(jax.random.normal(k5, shape3) * 2.0)
    d = jnp.round(jax.random.normal(k6, shape3) * 2.0)
    acc3 = jax.block_until_ready(bvr_accuracy(c, d))
    ref3 = jnp.mean((c == d).astype(jnp.float32))
    assert jnp.allclose(acc3, ref3, atol=1e-6), (acc3, ref3)

    print("KERNEL_OK")
</pallas_src>

<mosaic_0001>
module attributes {stable_mosaic.version = 11 : i64} {
  func.func @kernel(%arg0: i32, %arg1: i32, %arg2: memref<16x128xi32, #tpu.memory_space<vmem>>, %arg3: memref<16x128xi32, #tpu.memory_space<vmem>>, %arg4: memref<8x128xi32, #tpu.memory_space<vmem>>) attributes {dimension_semantics = [#tpu.dimension_semantics<parallel>, #tpu.dimension_semantics<arbitrary>], iteration_bounds = array<i64: 1, 1>, scalar_prefetch = 0 : i64, scratch_operands = 0 : i64, tpu.core_type = #tpu.core_type<tc>, window_params = [{transform_indices = @transform_0, window_bounds = array<i64: 16, 128>}, {transform_indices = @transform_1, window_bounds = array<i64: 16, 128>}, {transform_indices = @transform_2, window_bounds = array<i64: 8, 128>}]} {
    %c1_i32 = arith.constant 1 : i32
    %0 = arith.muli %arg0, %c1_i32 : i32
    %1 = arith.addi %0, %arg1 : i32
    %c0_i32 = arith.constant 0 : i32
    %2 = arith.cmpi eq, %arg1, %c0_i32 : i32
    %3 = arith.extui %2 : i1 to i32
    %c0_i32_0 = arith.constant 0 : i32
    %4 = arith.cmpi ne, %3, %c0_i32_0 : i32
    scf.if %4 {
      %c0_i32_3 = arith.constant 0 : i32
      %8 = vector.broadcast %c0_i32_3 : i32 to vector<8x128xi32>
      %c0 = arith.constant 0 : index
      %c0_4 = arith.constant 0 : index
      %9 = vector.load %arg4[%c0, %c0_4] : memref<8x128xi32, #tpu.memory_space<vmem>>, vector<8x128xi32>
      tpu.vector_store %arg4[%c0, %c0_4], %8 {strides = array<i32>} : memref<8x128xi32, #tpu.memory_space<vmem>>, vector<8x128xi32>,
    } else {
    }
    %c0_i32_1 = arith.constant 0 : i32
    %5 = arith.cmpi sle, %1, %c0_i32_1 : i32
    %6 = arith.extui %5 : i1 to i32
    %c0_i32_2 = arith.constant 0 : i32
    %7 = arith.cmpi ne, %6, %c0_i32_2 : i32
    scf.if %7 {
      %c0_i32_3 = arith.constant 0 : i32
      %8 = vector.broadcast %c0_i32_3 : i32 to vector<8x128xi32>
      %c0 = arith.constant 0 : index
      %c0_4 = arith.constant 0 : index
      %9 = vector.load %arg2[%c0, %c0_4] : memref<16x128xi32, #tpu.memory_space<vmem>>, vector<16x128xi32>
      %c0_5 = arith.constant 0 : index
      %c0_6 = arith.constant 0 : index
      %10 = vector.load %arg3[%c0_5, %c0_6] : memref<16x128xi32, #tpu.memory_space<vmem>>, vector<16x128xi32>
      %11 = arith.cmpi eq, %9, %10 : vector<16x128xi32>
      %12 = arith.extui %11 : vector<16x128xi1> to vector<16x128xi32>
      %13 = vector.shape_cast %12 : vector<16x128xi32> to vector<2x8x128xi32>
      %cst = arith.constant dense<0> : vector<8x128xi32>
      %14 = vector.multi_reduction <add>, %13, %cst [0] : vector<2x8x128xi32> to vector<8x128xi32>
      %15 = arith.addi %8, %14 : vector<8x128xi32>
      %c0_7 = arith.constant 0 : index
      %c0_8 = arith.constant 0 : index
      %16 = vector.load %arg4[%c0_7, %c0_8] : memref<8x128xi32, #tpu.memory_space<vmem>>, vector<8x128xi32>
      %17 = arith.addi %16, %15 : vector<8x128xi32>
      %c0_9 = arith.constant 0 : index
      %c0_10 = arith.constant 0 : index
      %18 = vector.load %arg4[%c0_9, %c0_10] : memref<8x128xi32, #tpu.memory_space<vmem>>, vector<8x128xi32>
      tpu.vector_store %arg4[%c0_9, %c0_10], %17 {strides = array<i32>} : memref<8x128xi32, #tpu.memory_space<vmem>>, vector<8x128xi32>,
    } else {
    }
    return
  }
  func.func @transform_0(%arg0: i32, %arg1: i32) -> (i32, i32) {
    %c1_i32 = arith.constant 1 : i32
    %0 = arith.muli %arg0, %c1_i32 : i32
    %1 = arith.addi %0, %arg1 : i32
    %c0_i32 = arith.constant 0 : i32
    %2 = arith.minsi %1, %c0_i32 : i32
    %c0_i32_0 = arith.constant 0 : i32
    %c0_i32_1 = arith.constant 0 : i32
    return %2, %c0_i32_0 : i32, i32
  }
  func.func @transform_1(%arg0: i32, %arg1: i32) -> (i32, i32) {
    %c1_i32 = arith.constant 1 : i32
    %0 = arith.muli %arg0, %c1_i32 : i32
    %1 = arith.addi %0, %arg1 : i32
    %c0_i32 = arith.constant 0 : i32
    %2 = arith.minsi %1, %c0_i32 : i32
    %c0_i32_0 = arith.constant 0 : i32
    %c0_i32_1 = arith.constant 0 : i32
    return %2, %c0_i32_0 : i32, i32
  }
  func.func @transform_2(%arg0: i32, %arg1: i32) -> (i32, i32) {
    %c0_i32 = arith.constant 0 : i32
    %c0_i32_0 = arith.constant 0 : i32
    return %arg0, %c0_i32 : i32, i32
  }
}

</mosaic_0001>

<llo_original>
// kernel: tpu_custom_call.1
$region0: #{tpu_custom_call.1}
  #allocation0 [shape = 'u32[]', space=smem, size = 0x4, offset = 0x4, fixed_abs, tag = 'smem constant byte address 0x4 - core index']
  #allocation1 [shape = 'u32[144,128]{1,0:T(1,128)}', space=vmem, size = 0x12000, scoped, tag = 'internal scratch']
  %s0 = inlined_call_operand.hbm [shape: s32[16,128], index: 0, kind: input, shape index: {}]
  %s1 = inlined_call_operand.hbm [shape: s32[16,128], index: 1, kind: input, shape index: {}]
  %s2 = inlined_call_operand.hbm [shape: s32[8,128], index: 2, kind: output, shape index: {}]
  %s3 = sld [smem:[#allocation0]]
  $region34: #{tpu_custom_call.1} parent=0
    _
  %s5 = ssub.s32 1, %s3
  %s6 = scalar_select 0, %s5, %s3
  $region1: #{tpu_custom_call.1} parent=0
    #allocation2 [shape = 'u8[8192]{0}', space=vmem, size = 0x2000, scoped, tag = 'input window, operand 0, single buffered']
    #allocation3 [shape = 's32[1]{0}', space=sflag, size = 0x4, scoped, tag = 'scoped memory for tpu_custom_call.1']
    #allocation4 [shape = 's32[1]{0}', space=sflag, size = 0x4, scoped, tag = 'scoped memory for tpu_custom_call.1']
    #allocation5 [shape = 'u8[8192]{0}', space=vmem, size = 0x2000, scoped, tag = 'input window, operand 1, single buffered']
    #allocation6 [shape = 's32[1]{0}', space=sflag, size = 0x4, scoped, tag = 'scoped memory for tpu_custom_call.1']
    #allocation7 [shape = 'u8[4096]{0}', space=vmem, size = 0x1000, scoped, tag = 'output window, operand 0, single buffered']
    %7 = vsyncpa [#allocation3], 0
    %8 = vsyncpa [#allocation6], 0
    %9 = vsyncpa [#allocation4], 0
    // Predicated region
    $region2: #{tpu_custom_call.1} parent=1 // pred_check
      _
    $region3: #{tpu_custom_call.1} parent=1 // pred_check_branch
      %11 = sbr.rel (0) target = $region5
    $region4: #{tpu_custom_call.1} parent=1 // pred_region
      %s12 = sadd.s32 0, 0
      %p13 = scmp.lt.s32.totalorder %s12, 0
      %s14 = scalar_select %p13, %s12, 0
      %s15 = smul.u32 2, %s14
      %s17 = ssub.s32 256, 256
      %18 = vsyncadd [#allocation3], %s17
      %s19 = smul.addr %s15, 128
      %s20 = scalar_lea.hbm %s0, %s19
      %s21 = sshll.u32 [#allocation2], 4
      %s22 = int_to_ptr.vmem [resolvable:$true] %s21
      %27 = dma.hbm_to_vmem [thread:$0]  %s20, 256, %s22, [#allocation3], 128, 128, 8
    $region5: #{tpu_custom_call.1} parent=1 // pred_fallthru
      _
    // Predicated region
    $region6: #{tpu_custom_call.1} parent=1 // pred_check
      _
    $region7: #{tpu_custom_call.1} parent=1 // pred_check_branch
      %29 = sbr.rel (0) target = $region9
    $region8: #{tpu_custom_call.1} parent=1 // pred_region
      %s30 = sadd.s32 0, 0
      %p31 = scmp.lt.s32.totalorder %s30, 0
      %s32 = scalar_select %p31, %s30, 0
      %s33 = smul.u32 2, %s32
      %s35 = ssub.s32 256, 256
      %36 = vsyncadd [#allocation6], %s35
      %s37 = smul.addr %s33, 128
      %s38 = scalar_lea.hbm %s1, %s37
      %s39 = sshll.u32 [#allocation5], 4
      %s40 = int_to_ptr.vmem [resolvable:$true] %s39
      %45 = dma.hbm_to_vmem [thread:$0]  %s38, 256, %s40, [#allocation6], 128, 128, 8
    $region9: #{tpu_custom_call.1} parent=1 // pred_fallthru
      _
    // Predicated region
    $region10: #{tpu_custom_call.1} parent=1 // pred_check
      _
    $region11: #{tpu_custom_call.1} parent=1 // pred_check_branch
      %47 = sbr.rel (0) target = $region13
    $region12: #{tpu_custom_call.1} parent=1 // pred_region
      %48 = dma.done [#allocation3], 256
    $region13: #{tpu_custom_call.1} parent=1 // pred_fallthru
      _
    // Predicated region
    $region14: #{tpu_custom_call.1} parent=1 // pred_check
      _
    $region15: #{tpu_custom_call.1} parent=1 // pred_check_branch
      %50 = sbr.rel (0) target = $region17
    $region16: #{tpu_custom_call.1} parent=1 // pred_region
      %51 = dma.done [#allocation6], 256
    $region17: #{tpu_custom_call.1} parent=1 // pred_fallthru
      _
    %s52 = sadd.s32 0, 0
    %p53 = scmp.lt.s32.totalorder %s52, 0
    %s54 = scalar_select %p53, %s52, 0
    %s55 = smul.u32 2, %s54
    %s56 = sadd.s32 0, 0
    %p57 = scmp.lt.s32.totalorder %s56, 0
    %s58 = scalar_select %p57, %s56, 0
    %s59 = smul.u32 2, %s58
    %s60 = sadd.s32 0, 0
    %p61 = scmp.eq.s32.totalorder 0, 0
    // Predicated region
    $region18: #{tpu_custom_call.1} parent=1 // pred_check
      %p62 = pneg %p61
    $region19: #{tpu_custom_call.1} parent=1 // pred_check_branch
      %64 = sbr.rel (%p62) target = $region21
    $region20: #{tpu_custom_call.1} parent=1 // pred_region
      %65 = vst [vmem:[#allocation7] sm:$0xff] 0
    $region21: #{tpu_custom_call.1} parent=1 // pred_fallthru
      _
    %p66 = scmp.le.s32.totalorder %s60, 0
    // Predicated region
    $region22: #{tpu_custom_call.1} parent=1 // pred_check
      %p67 = pneg %p66
    $region23: #{tpu_custom_call.1} parent=1 // pred_check_branch
      %69 = sbr.rel (%p67) target = $region25
    $region24: #{tpu_custom_call.1} parent=1 // pred_region
      %v70 = vld [vmem:[#allocation2] sm:$0xff]
      %v71 = vld [vmem:[#allocation2 + $0x8] sm:$0xff]
      %v72 = vld [vmem:[#allocation5] sm:$0xff]
      %v73 = vld [vmem:[#allocation5 + $0x8] sm:$0xff]
      %vm74 = vcmp.eq.s32.totalorder %v70, %v72
      %vm75 = vcmp.eq.s32.totalorder %v71, %v73
      %v76 = vsel %vm74, 1, 0
      %v77 = vsel %vm75, 1, 0
      %v78 = vadd.s32 %v76, %v77
      %v79 = vld [vmem:[#allocation7] sm:$0xff]
      %v80 = vadd.s32 %v79, %v78
      %81 = vst [vmem:[#allocation7] sm:$0xff] %v80
    $region25: #{tpu_custom_call.1} parent=1 // pred_fallthru
      _
    // Predicated region
    $region26: #{tpu_custom_call.1} parent=1 // pred_check
      _
    $region27: #{tpu_custom_call.1} parent=1 // pred_check_branch
      %83 = sbr.rel (0) target = $region29
    $region28: #{tpu_custom_call.1} parent=1 // pred_region
      %s85 = ssub.s32 128, 128
      %86 = vsyncadd [#allocation4], %s85
      %s88 = sshll.u32 [#allocation7], 4
      %s89 = int_to_ptr.vmem [resolvable:$true] %s88
      %91 = dma.vmem_to_hbm [thread:$0]  %s89, 128, %s2, [#allocation4]
    $region29: #{tpu_custom_call.1} parent=1 // pred_fallthru
      _
    // Predicated region
    $region30: #{tpu_custom_call.1} parent=1 // pred_check
      _
    $region31: #{tpu_custom_call.1} parent=1 // pred_check_branch
      %93 = sbr.rel (0) target = $region33
    $region32: #{tpu_custom_call.1} parent=1 // pred_region
      %94 = dma.done [#allocation4], 128
    $region33: #{tpu_custom_call.1} parent=1 // pred_fallthru
      _
    %95 = vsyncpa [#allocation3], 1
    %96 = vsyncpa [#allocation6], 1
    %97 = vsyncpa [#allocation4], 1

</llo_original>
